<compile_context>
chip_gen: v7x
topology: tpu7x:2x2x1
jax: 0.10.0
libtpu: 0.0.40
codegen_flags: <defaults>
</compile_context>

<pallas_src>
import jax
import jax.numpy as jnp
from jax.experimental import pallas as pl
from jax.experimental.pallas import tpu as pltpu

EPS = 1e-5

# Row layout of the small-vector rows appended to the slab ([8, H], padded to
# a full sublane set). Row 4 holds b3 in its first `num_outputs` lanes.
_ROW_G1, _ROW_BE1, _ROW_G2, _ROW_BE2, _ROW_B3 = 0, 1, 2, 3, 4
_PACK_ROWS = 8


def _scalar_two_layer_kernel(x_ref, slab_ref, w3_ref, o_ref):
    """Fused Linear->BN->ReLU -> Linear->BN->ReLU -> Linear, all in VMEM."""
    n_in = x_ref.shape[1]
    H = w3_ref.shape[0]
    n_out = o_ref.shape[1]

    # Static, sublane-aligned slices of the single packed slab (one DMA).
    w1 = slab_ref[0:n_in, :]                       # [In, H]
    w2 = slab_ref[n_in:n_in + H, :]                # [H, H]
    vecs = slab_ref[n_in + H:n_in + H + _PACK_ROWS, :]   # [8, H]

    g1, be1 = vecs[_ROW_G1:_ROW_G1 + 1, :], vecs[_ROW_BE1:_ROW_BE1 + 1, :]
    g2, be2 = vecs[_ROW_G2:_ROW_G2 + 1, :], vecs[_ROW_BE2:_ROW_BE2 + 1, :]
    b3 = vecs[_ROW_B3:_ROW_B3 + 1, :n_out]

    def bn_relu(h, g, be):
        # Train-mode BatchNorm1d: batch mean, biased variance, eps=1e-5.
        # One-pass stats (mean of h and h*h) + single FMA normalize on [B,H].
        mu = jnp.mean(h, axis=0, keepdims=True)                  # [1, H]
        ex2 = jnp.mean(h * h, axis=0, keepdims=True)             # [1, H]
        var = jnp.maximum(ex2 - mu * mu, 0.0)                    # clamp cancellation
        scale = g * jax.lax.rsqrt(var + EPS)                     # [1, H]
        shift = be - mu * scale                                  # [1, H]
        return jnp.maximum(h * scale + shift, 0.0)               # 1 FMA + relu on [B,H]

    x = x_ref[...]                                               # [B, In]

    # Layer 1 (Linear bias omitted: cancels exactly under train-mode BN).
    h = jnp.dot(x, w1, preferred_element_type=jnp.float32)       # [B, H]
    h = bn_relu(h, g1, be1)

    # Layer 2 (bias likewise cancels).
    h = jnp.dot(h, w2, preferred_element_type=jnp.float32)       # [B, H]
    h = bn_relu(h, g2, be2)

    # Output layer: Linear with bias.
    out = jnp.dot(h, w3_ref[...], preferred_element_type=jnp.float32)  # [B, Out]
    o_ref[...] = (out + b3).astype(o_ref.dtype)


def pack_params(params):
    """Build the single [In+H+8, H] slab ONCE (hoisted out of the per-call path)."""
    H = params["w1"].shape[1]
    n_out = params["w3"].shape[1]
    assert n_out <= H, "packed-vector rows assume num_outputs <= num_neurons"

    b3_row = jnp.pad(params["b3"], ((0, 0), (0, H - n_out)))
    vec_rows = jnp.concatenate(
        [params["g1"], params["be1"], params["g2"], params["be2"], b3_row,
         jnp.zeros((_PACK_ROWS - 5, H), jnp.float32)],
        axis=0)                                                   # [8, H]
    slab = jnp.concatenate([params["w1"], params["w2"], vec_rows], axis=0)
    return {"slab": slab, "w3": params["w3"]}


def scalar_two_layer(x, packed):
    """x: [B, num_inputs] f32. packed: dict from pack_params (slab + w3)."""
    B = x.shape[0]
    n_out = packed["w3"].shape[1]

    # Size the VMEM limit from actual shapes (with headroom for compiler
    # matmul/reduction scratch) instead of a hard-coded small number.
    live_bytes = 4 * (x.size + packed["slab"].size + packed["w3"].size + B * n_out)
    vmem_limit = int(max(8 << 20, 4 * live_bytes))

    vmem = pl.BlockSpec(memory_space=pltpu.MemorySpace.VMEM)

    # Everything fits in VMEM at once: no grid, whole-array blocks, single
    # invocation (matmuls + BN reductions + ReLU fused). 3 input DMAs total.
    return pl.pallas_call(
        _scalar_two_layer_kernel,
        out_shape=jax.ShapeDtypeStruct((B, n_out), jnp.float32),
        in_specs=[vmem, vmem, vmem],
        out_specs=vmem,
        compiler_params=pltpu.CompilerParams(vmem_limit_bytes=vmem_limit),
    )(x, packed["slab"], packed["w3"])


def init_params(key, num_inputs, num_outputs, num_neurons=256):
    """Synthetic init mirroring the torch module's shapes.

    Linear weights follow PyTorch's U(-1/sqrt(fan_in), 1/sqrt(fan_in)) init;
    BatchNorm gamma=1, beta=0. Weights stored pre-transposed as [in, out].
    b1/b2 are created for fidelity with the torch module (and used by the
    reference) even though the kernel proves they cancel under train-mode BN.
    """
    ks = jax.random.split(key, 6)

    def lin(kw, kb, fan_in, fan_out):
        bound = 1.0 / jnp.sqrt(float(fan_in))
        w = jax.random.uniform(kw, (fan_in, fan_out), jnp.float32, -bound, bound)
        b = jax.random.uniform(kb, (1, fan_out), jnp.float32, -bound, bound)
        return w, b

    w1, b1 = lin(ks[0], ks[1], num_inputs, num_neurons)
    w2, b2 = lin(ks[2], ks[3], num_neurons, num_neurons)
    w3, b3 = lin(ks[4], ks[5], num_neurons, num_outputs)

    return dict(
        w1=w1, b1=b1,
        g1=jnp.ones((1, num_neurons), jnp.float32),
        be1=jnp.zeros((1, num_neurons), jnp.float32),
        w2=w2, b2=b2,
        g2=jnp.ones((1, num_neurons), jnp.float32),
        be2=jnp.zeros((1, num_neurons), jnp.float32),
        w3=w3, b3=b3,
    )


def _reference(x, p):
    """Pure-JAX reference with the *full* PyTorch math (including b1/b2 and the
    two-pass variance), so the allclose check also verifies the
    bias-cancels-under-BN and one-pass-variance claims."""
    def block(h, w, b, g, be):
        h = h @ w + b
        mu = jnp.mean(h, axis=0, keepdims=True)
        var = jnp.mean((h - mu) ** 2, axis=0, keepdims=True)
        h = (h - mu) / jnp.sqrt(var + EPS) * g + be
        return jnp.maximum(h, 0.0)
    h = block(x, p["w1"], p["b1"], p["g1"], p["be1"])
    h = block(h, p["w2"], p["b2"], p["g2"], p["be2"])
    return h @ p["w3"] + p["b3"]


if __name__ == "__main__":
    num_inputs, num_outputs, num_neurons = 32, 16, 256
    batch = 8

    key = jax.random.PRNGKey(0)
    k_x, k_p = jax.random.split(key)

    x = jax.random.normal(k_x, (batch, num_inputs), jnp.float32)
    params = init_params(k_p, num_inputs, num_outputs, num_neurons)
    packed = jax.tree_util.tree_map(jax.block_until_ready, pack_params(params))

    out = jax.jit(scalar_two_layer)(x, packed)
    out = jax.block_until_ready(out)

    ref = _reference(x, params)
    assert out.shape == (batch, num_outputs)
    assert jnp.allclose(out, ref, atol=1e-4, rtol=1e-4), "mismatch vs reference"

    print("KERNEL_OK")
</pallas_src>

<mosaic_0001>
module attributes {stable_mosaic.version = 11 : i64} {
  func.func @_scalar_two_layer_kernel(%arg0: memref<8x32xf32, #tpu.memory_space<vmem>>, %arg1: memref<296x256xf32, #tpu.memory_space<vmem>>, %arg2: memref<256x16xf32, #tpu.memory_space<vmem>>, %arg3: memref<8x16xf32, #tpu.memory_space<vmem>>) attributes {dimension_semantics = [], scalar_prefetch = 0 : i64, scratch_operands = 0 : i64, tpu.core_type = #tpu.core_type<tc>} {
    %c0 = arith.constant 0 : index
    %c0_0 = arith.constant 0 : index
    %0 = vector.load %arg1[%c0, %c0_0] : memref<296x256xf32, #tpu.memory_space<vmem>>, vector<32x256xf32>
    %c32 = arith.constant 32 : index
    %c0_1 = arith.constant 0 : index
    %1 = vector.load %arg1[%c32, %c0_1] : memref<296x256xf32, #tpu.memory_space<vmem>>, vector<256x256xf32>
    %c288 = arith.constant 288 : index
    %c0_2 = arith.constant 0 : index
    %2 = vector.load %arg1[%c288, %c0_2] : memref<296x256xf32, #tpu.memory_space<vmem>>, vector<8x256xf32>
    %3 = vector.extract_strided_slice %2 {offsets = [0, 0], sizes = [1, 256], strides = [1, 1]} : vector<8x256xf32> to vector<1x256xf32>
    %4 = vector.extract_strided_slice %2 {offsets = [1, 0], sizes = [1, 256], strides = [1, 1]} : vector<8x256xf32> to vector<1x256xf32>
    %5 = vector.extract_strided_slice %2 {offsets = [2, 0], sizes = [1, 256], strides = [1, 1]} : vector<8x256xf32> to vector<1x256xf32>
    %6 = vector.extract_strided_slice %2 {offsets = [3, 0], sizes = [1, 256], strides = [1, 1]} : vector<8x256xf32> to vector<1x256xf32>
    %7 = vector.extract_strided_slice %2 {offsets = [4, 0], sizes = [1, 16], strides = [1, 1]} : vector<8x256xf32> to vector<1x16xf32>
    %c0_3 = arith.constant 0 : index
    %c0_4 = arith.constant 0 : index
    %8 = vector.load %arg0[%c0_3, %c0_4] : memref<8x32xf32, #tpu.memory_space<vmem>>, vector<8x32xf32>
    %cst = arith.constant dense<0.000000e+00> : vector<8x256xf32>
    %9 = tpu.matmul %8, %0, %cst {dimension_numbers = #tpu.dot_dimension_numbers<[1], [0], [0], [1], [0, 0, 1, 1], [], []>} : vector<8x32xf32>, vector<32x256xf32>, vector<8x256xf32> -> vector<8x256xf32>
    %cst_5 = arith.constant dense<0.000000e+00> : vector<256xf32>
    %10 = vector.multi_reduction <add>, %9, %cst_5 [0] : vector<8x256xf32> to vector<256xf32>
    %11 = vector.shape_cast %10 : vector<256xf32> to vector<1x256xf32>
    %cst_6 = arith.constant 8.000000e+00 : f32
    %12 = vector.broadcast %cst_6 : f32 to vector<1x256xf32>
    %13 = arith.divf %11, %12 : vector<1x256xf32>
    %14 = arith.mulf %9, %9 : vector<8x256xf32>
    %cst_7 = arith.constant dense<0.000000e+00> : vector<256xf32>
    %15 = vector.multi_reduction <add>, %14, %cst_7 [0] : vector<8x256xf32> to vector<256xf32>
    %16 = vector.shape_cast %15 : vector<256xf32> to vector<1x256xf32>
    %cst_8 = arith.constant 8.000000e+00 : f32
    %17 = vector.broadcast %cst_8 : f32 to vector<1x256xf32>
    %18 = arith.divf %16, %17 : vector<1x256xf32>
    %19 = arith.mulf %13, %13 : vector<1x256xf32>
    %20 = arith.subf %18, %19 : vector<1x256xf32>
    %cst_9 = arith.constant 0.000000e+00 : f32
    %21 = vector.broadcast %cst_9 : f32 to vector<1x256xf32>
    %22 = arith.maximumf %20, %21 : vector<1x256xf32>
    %cst_10 = arith.constant 9.99999974E-6 : f32
    %23 = vector.broadcast %cst_10 : f32 to vector<1x256xf32>
    %24 = arith.addf %22, %23 : vector<1x256xf32>
    %25 = math.rsqrt %24 : vector<1x256xf32>
    %26 = arith.mulf %3, %25 : vector<1x256xf32>
    %27 = arith.mulf %13, %26 : vector<1x256xf32>
    %28 = arith.subf %4, %27 : vector<1x256xf32>
    %29 = vector.broadcast %26 : vector<1x256xf32> to vector<8x256xf32>
    %30 = arith.mulf %9, %29 : vector<8x256xf32>
    %31 = vector.broadcast %28 : vector<1x256xf32> to vector<8x256xf32>
    %32 = arith.addf %30, %31 : vector<8x256xf32>
    %cst_11 = arith.constant 0.000000e+00 : f32
    %33 = vector.broadcast %cst_11 : f32 to vector<8x256xf32>
    %34 = arith.maximumf %32, %33 : vector<8x256xf32>
    %cst_12 = arith.constant dense<0.000000e+00> : vector<8x256xf32>
    %35 = tpu.matmul %34, %1, %cst_12 {dimension_numbers = #tpu.dot_dimension_numbers<[1], [0], [0], [1], [0, 0, 1, 1], [], []>} : vector<8x256xf32>, vector<256x256xf32>, vector<8x256xf32> -> vector<8x256xf32>
    %cst_13 = arith.constant dense<0.000000e+00> : vector<256xf32>
    %36 = vector.multi_reduction <add>, %35, %cst_13 [0] : vector<8x256xf32> to vector<256xf32>
    %37 = vector.shape_cast %36 : vector<256xf32> to vector<1x256xf32>
    %cst_14 = arith.constant 8.000000e+00 : f32
    %38 = vector.broadcast %cst_14 : f32 to vector<1x256xf32>
    %39 = arith.divf %37, %38 : vector<1x256xf32>
    %40 = arith.mulf %35, %35 : vector<8x256xf32>
    %cst_15 = arith.constant dense<0.000000e+00> : vector<256xf32>
    %41 = vector.multi_reduction <add>, %40, %cst_15 [0] : vector<8x256xf32> to vector<256xf32>
    %42 = vector.shape_cast %41 : vector<256xf32> to vector<1x256xf32>
    %cst_16 = arith.constant 8.000000e+00 : f32
    %43 = vector.broadcast %cst_16 : f32 to vector<1x256xf32>
    %44 = arith.divf %42, %43 : vector<1x256xf32>
    %45 = arith.mulf %39, %39 : vector<1x256xf32>
    %46 = arith.subf %44, %45 : vector<1x256xf32>
    %cst_17 = arith.constant 0.000000e+00 : f32
    %47 = vector.broadcast %cst_17 : f32 to vector<1x256xf32>
    %48 = arith.maximumf %46, %47 : vector<1x256xf32>
    %cst_18 = arith.constant 9.99999974E-6 : f32
    %49 = vector.broadcast %cst_18 : f32 to vector<1x256xf32>
    %50 = arith.addf %48, %49 : vector<1x256xf32>
    %51 = math.rsqrt %50 : vector<1x256xf32>
    %52 = arith.mulf %5, %51 : vector<1x256xf32>
    %53 = arith.mulf %39, %52 : vector<1x256xf32>
    %54 = arith.subf %6, %53 : vector<1x256xf32>
    %55 = vector.broadcast %52 : vector<1x256xf32> to vector<8x256xf32>
    %56 = arith.mulf %35, %55 : vector<8x256xf32>
    %57 = vector.broadcast %54 : vector<1x256xf32> to vector<8x256xf32>
    %58 = arith.addf %56, %57 : vector<8x256xf32>
    %cst_19 = arith.constant 0.000000e+00 : f32
    %59 = vector.broadcast %cst_19 : f32 to vector<8x256xf32>
    %60 = arith.maximumf %58, %59 : vector<8x256xf32>
    %c0_20 = arith.constant 0 : index
    %c0_21 = arith.constant 0 : index
    %61 = vector.load %arg2[%c0_20, %c0_21] : memref<256x16xf32, #tpu.memory_space<vmem>>, vector<256x16xf32>
    %cst_22 = arith.constant dense<0.000000e+00> : vector<8x16xf32>
    %62 = tpu.matmul %60, %61, %cst_22 {dimension_numbers = #tpu.dot_dimension_numbers<[1], [0], [0], [1], [0, 0, 1, 1], [], []>} : vector<8x256xf32>, vector<256x16xf32>, vector<8x16xf32> -> vector<8x16xf32>
    %63 = vector.broadcast %7 : vector<1x16xf32> to vector<8x16xf32>
    %64 = arith.addf %62, %63 : vector<8x16xf32>
    %c0_23 = arith.constant 0 : index
    %c0_24 = arith.constant 0 : index
    %65 = vector.load %arg3[%c0_23, %c0_24] : memref<8x16xf32, #tpu.memory_space<vmem>>, vector<8x16xf32>
    tpu.vector_store %arg3[%c0_23, %c0_24], %64 {strides = array<i32>} : memref<8x16xf32, #tpu.memory_space<vmem>>, vector<8x16xf32>,
    return
  }
}

</mosaic_0001>

<llo_original>
// kernel: scalar_two_layer.1
$region0: #{scalar_two_layer.1}
  #allocation0 [shape = 'u32[]', space=smem, size = 0x4, offset = 0x4, fixed_abs, tag = 'smem constant byte address 0x4 - core index']
  #allocation1 [shape = 'u32[144,128]{1,0:T(1,128)}', space=vmem, size = 0x12000, scoped, tag = 'internal scratch']
  %s0 = inlined_call_operand.vmem [shape: f32[8,32], index: 0, kind: input, shape index: {}]
  %s1 = inlined_call_operand.hbm [shape: f32[296,256], index: 1, kind: input, shape index: {}]
  %s2 = inlined_call_operand.vmem [shape: f32[256,16], index: 2, kind: input, shape index: {}]
  %s3 = inlined_call_operand.hbm [shape: f32[8,16], index: 3, kind: output, shape index: {}]
  %s4 = sld [smem:[#allocation0]]
  $region26: #{scalar_two_layer.1} parent=0
    _
  %s6 = ssub.s32 1, %s4
  %s7 = scalar_select 0, %s6, %s4
  $region1: #{scalar_two_layer.1} parent=0
    #allocation2 [shape = 'u8[303104]{0}', space=vmem, size = 0x4a000, scoped, tag = 'input window, operand 1, single buffered']
    #allocation3 [shape = 's32[1]{0}', space=sflag, size = 0x4, scoped, tag = 'scoped memory for scalar_two_layer.1']
    #allocation4 [shape = 's32[1]{0}', space=sflag, size = 0x4, scoped, tag = 'scoped memory for scalar_two_layer.1']
    #allocation5 [shape = 'u8[4096]{0}', space=vmem, size = 0x1000, scoped, tag = 'output window, operand 0, single buffered']
    %8 = vsyncpa [#allocation3], 0
    %9 = vsyncpa [#allocation4], 0
    // Predicated region
    $region2: #{scalar_two_layer.1} parent=1 // pred_check
      _
    $region3: #{scalar_two_layer.1} parent=1 // pred_check_branch
      %11 = sbr.rel (0) target = $region5
    $region4: #{scalar_two_layer.1} parent=1 // pred_region
      _
    $region5: #{scalar_two_layer.1} parent=1 // pred_fallthru
      _
    // Predicated region
    $region6: #{scalar_two_layer.1} parent=1 // pred_check
      _
    $region7: #{scalar_two_layer.1} parent=1 // pred_check_branch
      %13 = sbr.rel (0) target = $region9
    $region8: #{scalar_two_layer.1} parent=1 // pred_region
      %s15 = ssub.s32 9472, 9472
      %16 = vsyncadd [#allocation3], %s15
      %s17 = sshll.u32 [#allocation2], 4
      %s18 = int_to_ptr.vmem [resolvable:$true] %s17
      %23 = dma.hbm_to_vmem [thread:$0]  %s1, 9472, %s18, [#allocation3], 256, 256, 16
    $region9: #{scalar_two_layer.1} parent=1 // pred_fallthru
      _
    // Predicated region
    $region10: #{scalar_two_layer.1} parent=1 // pred_check
      _
    $region11: #{scalar_two_layer.1} parent=1 // pred_check_branch
      %25 = sbr.rel (0) target = $region13
    $region12: #{scalar_two_layer.1} parent=1 // pred_region
      _
    $region13: #{scalar_two_layer.1} parent=1 // pred_fallthru
      _
    // Predicated region
    $region14: #{scalar_two_layer.1} parent=1 // pred_check
      _
    $region15: #{scalar_two_layer.1} parent=1 // pred_check_branch
      %27 = sbr.rel (0) target = $region17
    $region16: #{scalar_two_layer.1} parent=1 // pred_region
      %28 = dma.done [#allocation3], 9472
    $region17: #{scalar_two_layer.1} parent=1 // pred_fallthru
      _
    %v29 = vld [vmem:[#allocation2] sm:$0xff]
    %v30 = vld [vmem:[#allocation2 + $0x8] sm:$0xff]
    %v31 = vld [vmem:[#allocation2 + $0x10] sm:$0xff]
    %v32 = vld [vmem:[#allocation2 + $0x18] sm:$0xff]
    %v33 = vld [vmem:[#allocation2 + $0x20] sm:$0xff]
    %v34 = vld [vmem:[#allocation2 + $0x28] sm:$0xff]
    %v35 = vld [vmem:[#allocation2 + $0x30] sm:$0xff]
    %v36 = vld [vmem:[#allocation2 + $0x38] sm:$0xff]
    %v37 = vld [vmem:[#allocation2 + $0x40] sm:$0xff]
    %v38 = vld [vmem:[#allocation2 + $0x48] sm:$0xff]
    %v39 = vld [vmem:[#allocation2 + $0x50] sm:$0xff]
    %v40 = vld [vmem:[#allocation2 + $0x58] sm:$0xff]
    %v41 = vld [vmem:[#allocation2 + $0x60] sm:$0xff]
    %v42 = vld [vmem:[#allocation2 + $0x68] sm:$0xff]
    %v43 = vld [vmem:[#allocation2 + $0x70] sm:$0xff]
    %v44 = vld [vmem:[#allocation2 + $0x78] sm:$0xff]
    %v45 = vld [vmem:[#allocation2 + $0x80] sm:$0xff]
    %v46 = vld [vmem:[#allocation2 + $0x88] sm:$0xff]
    %v47 = vld [vmem:[#allocation2 + $0x90] sm:$0xff]
    %v48 = vld [vmem:[#allocation2 + $0x98] sm:$0xff]
    %v49 = vld [vmem:[#allocation2 + $0xa0] sm:$0xff]
    %v50 = vld [vmem:[#allocation2 + $0xa8] sm:$0xff]
    %v51 = vld [vmem:[#allocation2 + $0xb0] sm:$0xff]
    %v52 = vld [vmem:[#allocation2 + $0xb8] sm:$0xff]
    %v53 = vld [vmem:[#allocation2 + $0xc0] sm:$0xff]
    %v54 = vld [vmem:[#allocation2 + $0xc8] sm:$0xff]
    %v55 = vld [vmem:[#allocation2 + $0xd0] sm:$0xff]
    %v56 = vld [vmem:[#allocation2 + $0xd8] sm:$0xff]
    %v57 = vld [vmem:[#allocation2 + $0xe0] sm:$0xff]
    %v58 = vld [vmem:[#allocation2 + $0xe8] sm:$0xff]
    %v59 = vld [vmem:[#allocation2 + $0xf0] sm:$0xff]
    %v60 = vld [vmem:[#allocation2 + $0xf8] sm:$0xff]
    %v61 = vld [vmem:[#allocation2 + $0x100] sm:$0xff]
    %v62 = vld [vmem:[#allocation2 + $0x108] sm:$0xff]
    %v63 = vld [vmem:[#allocation2 + $0x110] sm:$0xff]
    %v64 = vld [vmem:[#allocation2 + $0x118] sm:$0xff]
    %v65 = vld [vmem:[#allocation2 + $0x120] sm:$0xff]
    %v66 = vld [vmem:[#allocation2 + $0x128] sm:$0xff]
    %v67 = vld [vmem:[#allocation2 + $0x130] sm:$0xff]
    %v68 = vld [vmem:[#allocation2 + $0x138] sm:$0xff]
    %v69 = vld [vmem:[#allocation2 + $0x140] sm:$0xff]
    %v70 = vld [vmem:[#allocation2 + $0x148] sm:$0xff]
    %v71 = vld [vmem:[#allocation2 + $0x150] sm:$0xff]
    %v72 = vld [vmem:[#allocation2 + $0x158] sm:$0xff]
    %v73 = vld [vmem:[#allocation2 + $0x160] sm:$0xff]
    %v74 = vld [vmem:[#allocation2 + $0x168] sm:$0xff]
    %v75 = vld [vmem:[#allocation2 + $0x170] sm:$0xff]
    %v76 = vld [vmem:[#allocation2 + $0x178] sm:$0xff]
    %v77 = vld [vmem:[#allocation2 + $0x180] sm:$0xff]
    %v78 = vld [vmem:[#allocation2 + $0x188] sm:$0xff]
    %v79 = vld [vmem:[#allocation2 + $0x190] sm:$0xff]
    %v80 = vld [vmem:[#allocation2 + $0x198] sm:$0xff]
    %v81 = vld [vmem:[#allocation2 + $0x1a0] sm:$0xff]
    %v82 = vld [vmem:[#allocation2 + $0x1a8] sm:$0xff]
    %v83 = vld [vmem:[#allocation2 + $0x1b0] sm:$0xff]
    %v84 = vld [vmem:[#allocation2 + $0x1b8] sm:$0xff]
    %v85 = vld [vmem:[#allocation2 + $0x1c0] sm:$0xff]
    %v86 = vld [vmem:[#allocation2 + $0x1c8] sm:$0xff]
    %v87 = vld [vmem:[#allocation2 + $0x1d0] sm:$0xff]
    %v88 = vld [vmem:[#allocation2 + $0x1d8] sm:$0xff]
    %v89 = vld [vmem:[#allocation2 + $0x1e0] sm:$0xff]
    %v90 = vld [vmem:[#allocation2 + $0x1e8] sm:$0xff]
    %v91 = vld [vmem:[#allocation2 + $0x1f0] sm:$0xff]
    %v92 = vld [vmem:[#allocation2 + $0x1f8] sm:$0xff]
    %v93 = vld [vmem:[#allocation2 + $0x200] sm:$0xff]
    %v94 = vld [vmem:[#allocation2 + $0x208] sm:$0xff]
    %v95 = vld [vmem:[#allocation2 + $0x210] sm:$0xff]
    %v96 = vld [vmem:[#allocation2 + $0x218] sm:$0xff]
    %v97 = vld [vmem:[#allocation2 + $0x220] sm:$0xff]
    %v98 = vld [vmem:[#allocation2 + $0x228] sm:$0xff]
    %v99 = vld [vmem:[#allocation2 + $0x230] sm:$0xff]
    %v100 = vld [vmem:[#allocation2 + $0x238] sm:$0xff]
    %v101 = vld [vmem:[#allocation2 + $0x240] sm:$0xff]
    %v102 = vld [vmem:[#allocation2 + $0x248] sm:$0xff]
    %v103 = vld [vmem:[%s0] sm:$0xff]
    %vm104 = vcmask 261120
    %v106 = vsel %vm104, %v103, 0
    %108 = vmatprep.subr.mxu0 %v30
    %109 = vmatpush1.msra.mxu0 %v29
    %110 = vmatprep.subr.mxu0 %v32
    %111 = vmatpush1.msra.mxu0 %v31
    %112 = vmatprep.subr.mxu0 %v34
    %113 = vmatpush1.msra.mxu0 %v33
    %114 = vmatprep.subr.mxu0 %v36
    %115 = vmatpush1.msra.mxu0 %v35
    %116 = vmatprep.subr.mxu0 0.0
    %117 = vmatpush1.msra.mxu0 0.0
    %118 = vmatprep.subr.mxu0 0.0
    %119 = vmatpush1.msra.mxu0 0.0
    %120 = vmatprep.subr.mxu0 0.0
    %121 = vmatpush1.msra.mxu0 0.0
    %122 = vmatprep.subr.mxu0 0.0
    %123 = vmatpush1.msra.mxu0 0.0
    %124 = vmatprep.subr.mxu0 0.0
    %125 = vmatpush1.msra.mxu0 0.0
    %126 = vmatprep.subr.mxu0 0.0
    %127 = vmatpush1.msra.mxu0 0.0
    %128 = vmatprep.subr.mxu0 0.0
    %129 = vmatpush1.msra.mxu0 0.0
    %130 = vmatprep.subr.mxu0 0.0
    %131 = vmatpush1.msra.mxu0 0.0
    %132 = vmatprep.subr.mxu0 0.0
    %133 = vmatpush1.msra.mxu0 0.0
    %134 = vmatprep.subr.mxu0 0.0
    %135 = vmatpush1.msra.mxu0 0.0
    %136 = vmatprep.subr.mxu0 0.0
    %137 = vmatpush1.msra.mxu0 0.0
    %138 = vmatprep.subr.mxu0 0.0
    %139 = vmatpush1.msra.mxu0 0.0
    %140 = vmatprep.subr.mxu0 0.0
    %141 = vmatpush1.msra.mxu0 0.0
    %142 = vmatprep.subr.mxu0 0.0
    %143 = vmatpush1.msra.mxu0 0.0
    %144 = vmatprep.subr.mxu0 0.0
    %145 = vmatpush1.msra.mxu0 0.0
    %146 = vmatprep.subr.mxu0 0.0
    %147 = vmatpush1.msra.mxu0 0.0
    %148 = vmatprep.subr.mxu0 0.0
    %149 = vmatpush1.msra.mxu0 0.0
    %150 = vmatprep.subr.mxu0 0.0
    %151 = vmatpush1.msra.mxu0 0.0
    %152 = vmatprep.subr.mxu0 0.0
    %153 = vmatpush1.msra.mxu0 0.0
    %154 = vmatprep.subr.mxu0 0.0
    %155 = vmatpush1.msra.mxu0 0.0
    %156 = vmatprep.subr.mxu0 0.0
    %157 = vmatpush1.msra.mxu0 0.0
    %158 = vmatprep.subr.mxu0 0.0
    %159 = vmatpush1.msra.mxu0 0.0
    %160 = vmatprep.subr.mxu0 0.0
    %161 = vmatpush1.msra.mxu0 0.0
    %162 = vmatprep.subr.mxu0 0.0
    %163 = vmatpush1.msra.mxu0 0.0
    %164 = vmatprep.subr.mxu0 0.0
    %165 = vmatpush1.msra.mxu0 0.0
    %166 = vmatprep.subr.mxu0 0.0
    %167 = vmatpush1.msra.mxu0 0.0
    %168 = vmatprep.subr.mxu0 0.0
    %169 = vmatpush1.msra.mxu0 0.0
    %170 = vmatprep.subr.mxu0 0.0
    %171 = vmatpush1.msra.mxu0 0.0
    %172 = vmatprep.mubr.f32.mxu0 0.0
    %173 = vmatmul.mubr.f32.gmra.mrb[0].mxu0 %v106
    %v174 = vpop.f32.mrb[0].mxu0
    %v175 = vadd.f32 0.0, %v174
    %v176 = vpop.f32.mrb[0].mxu0
    %v177 = vadd.f32 0.0, %v176
    %178 = vdwg.mxu0
    %v179 = vrot.slane %v175, 4
    %v180 = vadd.f32 %v175, %v179
    %v181 = vrot.slane %v180, 2
    %v182 = vadd.f32 %v180, %v181
    %v183 = vrot.slane %v182, 1
    %v184 = vadd.f32 %v182, %v183
    %v185 = vrot.slane %v177, 4
    %v186 = vadd.f32 %v177, %v185
    %v187 = vrot.slane %v186, 2
    %v188 = vadd.f32 %v186, %v187
    %v189 = vrot.slane %v188, 1
    %v190 = vadd.f32 %v188, %v189
    %v191 = vrcp.pop 8.0
    %v192 = vmul.f32 %v184, %v191
    %v193 = vmul.f32 %v190, %v191
    %v194 = vmul.f32 %v175, %v175
    %v195 = vmul.f32 %v177, %v177
    %v196 = vrot.slane %v194, 4
    %v197 = vadd.f32 %v194, %v196
    %v198 = vrot.slane %v197, 2
    %v199 = vadd.f32 %v197, %v198
    %v200 = vrot.slane %v199, 1
    %v201 = vadd.f32 %v199, %v200
    %v202 = vrot.slane %v195, 4
    %v203 = vadd.f32 %v195, %v202
    %v204 = vrot.slane %v203, 2
    %v205 = vadd.f32 %v203, %v204
    %v206 = vrot.slane %v205, 1
    %v207 = vadd.f32 %v205, %v206
    %v208 = vmul.f32 %v201, %v191
    %v209 = vmul.f32 %v207, %v191
    %v210 = vmul.f32 %v192, %v192
    %v211 = vmul.f32 %v193, %v193
    %v212 = vsub.f32 %v208, %v210
    %v213 = vsub.f32 %v209, %v211
    %v214 = vmax.f32 %v212, 0.0
    %v215 = vmax.f32 %v213, 0.0
    %v216 = vadd.f32 %v214, 1e-05
    %v217 = vadd.f32 %v215, 1e-05
    %v218 = vrsqrt.pop %v216
    %v219 = vrsqrt.pop %v217
    %v220 = vmul.f32 %v101, %v218
    %v221 = vmul.f32 %v102, %v219
    %v222 = vmul.f32 %v192, %v220
    %v223 = vmul.f32 %v193, %v221
    %v226 = vrot.slane %v222, 7
    %v227 = vrot.slane %v223, 7
    %v230 = vsub.f32 %v101, %v226
    %v231 = vsub.f32 %v102, %v227
    %v232 = vlaneseq
    %v233 = vshrl.u32 %v232, 7
    %v234 = vsub.s32 0, %v233
    %v235 = vrot.slane %v220, %v234
    %v236 = vlaneseq
    %v237 = vshrl.u32 %v236, 7
    %v238 = vsub.s32 0, %v237
    %v239 = vrot.slane %v221, %v238
    %v240 = vmul.f32 %v175, %v235
    %v241 = vmul.f32 %v177, %v239
    %v242 = vlaneseq
    %v243 = vshrl.u32 %v242, 7
    %v244 = vsub.s32 1, %v243
    %v245 = vrot.slane %v230, %v244
    %v246 = vlaneseq
    %v247 = vshrl.u32 %v246, 7
    %v248 = vsub.s32 1, %v247
    %v249 = vrot.slane %v231, %v248
    %v250 = vadd.f32 %v240, %v245
    %v251 = vadd.f32 %v241, %v249
    %v252 = vmax.f32 %v250, 0.0
    %v253 = vmax.f32 %v251, 0.0
    %254 = vmatprep.subr.mxu0 %v38
    %255 = vmatpush1.msra.mxu0 %v37
    %256 = vmatprep.subr.mxu0 %v40
    %257 = vmatpush1.msra.mxu0 %v39
    %258 = vmatprep.subr.mxu0 %v42
    %259 = vmatpush1.msra.mxu0 %v41
    %260 = vmatprep.subr.mxu0 %v44
    %261 = vmatpush1.msra.mxu0 %v43
    %262 = vmatprep.subr.mxu0 %v46
    %263 = vmatpush1.msra.mxu0 %v45
    %264 = vmatprep.subr.mxu0 %v48
    %265 = vmatpush1.msra.mxu0 %v47
    %266 = vmatprep.subr.mxu0 %v50
    %267 = vmatpush1.msra.mxu0 %v49
    %268 = vmatprep.subr.mxu0 %v52
    %269 = vmatpush1.msra.mxu0 %v51
    %270 = vmatprep.subr.mxu0 %v54
    %271 = vmatpush1.msra.mxu0 %v53
    %272 = vmatprep.subr.mxu0 %v56
    %273 = vmatpush1.msra.mxu0 %v55
    %274 = vmatprep.subr.mxu0 %v58
    %275 = vmatpush1.msra.mxu0 %v57
    %276 = vmatprep.subr.mxu0 %v60
    %277 = vmatpush1.msra.mxu0 %v59
    %278 = vmatprep.subr.mxu0 %v62
    %279 = vmatpush1.msra.mxu0 %v61
    %280 = vmatprep.subr.mxu0 %v64
    %281 = vmatpush1.msra.mxu0 %v63
    %282 = vmatprep.subr.mxu0 %v66
    %283 = vmatpush1.msra.mxu0 %v65
    %284 = vmatprep.subr.mxu0 %v68
    %285 = vmatpush1.msra.mxu0 %v67
    %286 = vmatprep.subr.mxu0 %v70
    %287 = vmatpush1.msra.mxu0 %v69
    %288 = vmatprep.subr.mxu0 %v72
    %289 = vmatpush1.msra.mxu0 %v71
    %290 = vmatprep.subr.mxu0 %v74
    %291 = vmatpush1.msra.mxu0 %v73
    %292 = vmatprep.subr.mxu0 %v76
    %293 = vmatpush1.msra.mxu0 %v75
    %294 = vmatprep.subr.mxu0 %v78
    %295 = vmatpush1.msra.mxu0 %v77
    %296 = vmatprep.subr.mxu0 %v80
    %297 = vmatpush1.msra.mxu0 %v79
    %298 = vmatprep.subr.mxu0 %v82
    %299 = vmatpush1.msra.mxu0 %v81
    %300 = vmatprep.subr.mxu0 %v84
    %301 = vmatpush1.msra.mxu0 %v83
    %302 = vmatprep.subr.mxu0 %v86
    %303 = vmatpush1.msra.mxu0 %v85
    %304 = vmatprep.subr.mxu0 %v88
    %305 = vmatpush1.msra.mxu0 %v87
    %306 = vmatprep.subr.mxu0 %v90
    %307 = vmatpush1.msra.mxu0 %v89
    %308 = vmatprep.subr.mxu0 %v92
    %309 = vmatpush1.msra.mxu0 %v91
    %310 = vmatprep.subr.mxu0 %v94
    %311 = vmatpush1.msra.mxu0 %v93
    %312 = vmatprep.subr.mxu0 %v96
    %313 = vmatpush1.msra.mxu0 %v95
    %314 = vmatprep.subr.mxu0 %v98
    %315 = vmatpush1.msra.mxu0 %v97
    %316 = vmatprep.subr.mxu0 %v100
    %317 = vmatpush1.msra.mxu0 %v99
    %318 = vmatprep.mubr.f32.mxu0 %v253
    %319 = vmatmul.mubr.f32.gmra.mrb[0].mxu0 %v252
    %v320 = vpop.f32.mrb[0].mxu0
    %v321 = vadd.f32 0.0, %v320
    %v322 = vpop.f32.mrb[0].mxu0
    %v323 = vadd.f32 0.0, %v322
    %324 = vdwg.mxu0
    %v325 = vrot.slane %v321, 4
    %v326 = vadd.f32 %v321, %v325
    %v327 = vrot.slane %v326, 2
    %v328 = vadd.f32 %v326, %v327
    %v329 = vrot.slane %v328, 1
    %v330 = vadd.f32 %v328, %v329
    %v331 = vrot.slane %v323, 4
    %v332 = vadd.f32 %v323, %v331
    %v333 = vrot.slane %v332, 2
    %v334 = vadd.f32 %v332, %v333
    %v335 = vrot.slane %v334, 1
    %v336 = vadd.f32 %v334, %v335
    %v337 = vmul.f32 %v330, %v191
    %v338 = vmul.f32 %v336, %v191
    %v339 = vmul.f32 %v321, %v321
    %v340 = vmul.f32 %v323, %v323
    %v341 = vrot.slane %v339, 4
    %v342 = vadd.f32 %v339, %v341
    %v343 = vrot.slane %v342, 2
    %v344 = vadd.f32 %v342, %v343
    %v345 = vrot.slane %v344, 1
    %v346 = vadd.f32 %v344, %v345
    %v347 = vrot.slane %v340, 4
    %v348 = vadd.f32 %v340, %v347
    %v349 = vrot.slane %v348, 2
    %v350 = vadd.f32 %v348, %v349
    %v351 = vrot.slane %v350, 1
    %v352 = vadd.f32 %v350, %v351
    %v353 = vmul.f32 %v346, %v191
    %v354 = vmul.f32 %v352, %v191
    %v355 = vmul.f32 %v337, %v337
    %v356 = vmul.f32 %v338, %v338
    %v357 = vsub.f32 %v353, %v355
    %v358 = vsub.f32 %v354, %v356
    %v359 = vmax.f32 %v357, 0.0
    %v360 = vmax.f32 %v358, 0.0
    %v361 = vadd.f32 %v359, 1e-05
    %v362 = vadd.f32 %v360, 1e-05
    %v363 = vrsqrt.pop %v361
    %v364 = vrsqrt.pop %v362
    %v365 = vmul.f32 %v101, %v363
    %v366 = vmul.f32 %v102, %v364
    %v367 = vmul.f32 %v337, %v365
    %v368 = vmul.f32 %v338, %v366
    %v371 = vrot.slane %v367, 7
    %v372 = vrot.slane %v368, 7
    %v375 = vsub.f32 %v101, %v371
    %v376 = vsub.f32 %v102, %v372
    %v377 = vlaneseq
    %v378 = vshrl.u32 %v377, 7
    %v379 = vsub.s32 2, %v378
    %v380 = vrot.slane %v365, %v379
    %v381 = vlaneseq
    %v382 = vshrl.u32 %v381, 7
    %v383 = vsub.s32 2, %v382
    %v384 = vrot.slane %v366, %v383
    %v385 = vmul.f32 %v321, %v380
    %v386 = vmul.f32 %v323, %v384
    %v387 = vlaneseq
    %v388 = vshrl.u32 %v387, 7
    %v389 = vsub.s32 3, %v388
    %v390 = vrot.slane %v375, %v389
    %v391 = vlaneseq
    %v392 = vshrl.u32 %v391, 7
    %v393 = vsub.s32 3, %v392
    %v394 = vrot.slane %v376, %v393
    %v395 = vadd.f32 %v385, %v390
    %v396 = vadd.f32 %v386, %v394
    %v397 = vmax.f32 %v395, 0.0
    %v398 = vmax.f32 %v396, 0.0
    %v399 = vld [vmem:[%s2] sm:$0xff]
    %v400 = vld [vmem:[%s2 + $0x8] sm:$0xff]
    %v401 = vld [vmem:[%s2 + $0x10] sm:$0xff]
    %v402 = vld [vmem:[%s2 + $0x18] sm:$0xff]
    %v403 = vld [vmem:[%s2 + $0x20] sm:$0xff]
    %v404 = vld [vmem:[%s2 + $0x28] sm:$0xff]
    %v405 = vld [vmem:[%s2 + $0x30] sm:$0xff]
    %v406 = vld [vmem:[%s2 + $0x38] sm:$0xff]
    %v407 = vld [vmem:[%s2 + $0x40] sm:$0xff]
    %v408 = vld [vmem:[%s2 + $0x48] sm:$0xff]
    %v409 = vld [vmem:[%s2 + $0x50] sm:$0xff]
    %v410 = vld [vmem:[%s2 + $0x58] sm:$0xff]
    %v411 = vld [vmem:[%s2 + $0x60] sm:$0xff]
    %v412 = vld [vmem:[%s2 + $0x68] sm:$0xff]
    %v413 = vld [vmem:[%s2 + $0x70] sm:$0xff]
    %v414 = vld [vmem:[%s2 + $0x78] sm:$0xff]
    %v415 = vld [vmem:[%s2 + $0x80] sm:$0xff]
    %v416 = vld [vmem:[%s2 + $0x88] sm:$0xff]
    %v417 = vld [vmem:[%s2 + $0x90] sm:$0xff]
    %v418 = vld [vmem:[%s2 + $0x98] sm:$0xff]
    %v419 = vld [vmem:[%s2 + $0xa0] sm:$0xff]
    %v420 = vld [vmem:[%s2 + $0xa8] sm:$0xff]
    %v421 = vld [vmem:[%s2 + $0xb0] sm:$0xff]
    %v422 = vld [vmem:[%s2 + $0xb8] sm:$0xff]
    %v423 = vld [vmem:[%s2 + $0xc0] sm:$0xff]
    %v424 = vld [vmem:[%s2 + $0xc8] sm:$0xff]
    %v425 = vld [vmem:[%s2 + $0xd0] sm:$0xff]
    %v426 = vld [vmem:[%s2 + $0xd8] sm:$0xff]
    %v427 = vld [vmem:[%s2 + $0xe0] sm:$0xff]
    %v428 = vld [vmem:[%s2 + $0xe8] sm:$0xff]
    %v429 = vld [vmem:[%s2 + $0xf0] sm:$0xff]
    %v430 = vld [vmem:[%s2 + $0xf8] sm:$0xff]
    %v431 = vlaneseq
    %v432 = vshrl.u32 %v431, 7
    %v433 = vsub.s32 4, %v432
    %v434 = vrot.slane %v101, %v433
    %435 = vmatprep.subr.mxu0 0.0
    %436 = vmatpush1.msra.mxu0 %v399
    %437 = vmatprep.subr.mxu0 0.0
    %438 = vmatpush1.msra.mxu0 %v400
    %439 = vmatprep.subr.mxu0 0.0
    %440 = vmatpush1.msra.mxu0 %v401
    %441 = vmatprep.subr.mxu0 0.0
    %442 = vmatpush1.msra.mxu0 %v402
    %443 = vmatprep.subr.mxu0 0.0
    %444 = vmatpush1.msra.mxu0 %v403
    %445 = vmatprep.subr.mxu0 0.0
    %446 = vmatpush1.msra.mxu0 %v404
    %447 = vmatprep.subr.mxu0 0.0
    %448 = vmatpush1.msra.mxu0 %v405
    %449 = vmatprep.subr.mxu0 0.0
    %450 = vmatpush1.msra.mxu0 %v406
    %451 = vmatprep.subr.mxu0 0.0
    %452 = vmatpush1.msra.mxu0 %v407
    %453 = vmatprep.subr.mxu0 0.0
    %454 = vmatpush1.msra.mxu0 %v408
    %455 = vmatprep.subr.mxu0 0.0
    %456 = vmatpush1.msra.mxu0 %v409
    %457 = vmatprep.subr.mxu0 0.0
    %458 = vmatpush1.msra.mxu0 %v410
    %459 = vmatprep.subr.mxu0 0.0
    %460 = vmatpush1.msra.mxu0 %v411
    %461 = vmatprep.subr.mxu0 0.0
    %462 = vmatpush1.msra.mxu0 %v412
    %463 = vmatprep.subr.mxu0 0.0
    %464 = vmatpush1.msra.mxu0 %v413
    %465 = vmatprep.subr.mxu0 0.0
    %466 = vmatpush1.msra.mxu0 %v414
    %467 = vmatprep.subr.mxu0 0.0
    %468 = vmatpush1.msra.mxu0 %v415
    %469 = vmatprep.subr.mxu0 0.0
    %470 = vmatpush1.msra.mxu0 %v416
    %471 = vmatprep.subr.mxu0 0.0
    %472 = vmatpush1.msra.mxu0 %v417
    %473 = vmatprep.subr.mxu0 0.0
    %474 = vmatpush1.msra.mxu0 %v418
    %475 = vmatprep.subr.mxu0 0.0
    %476 = vmatpush1.msra.mxu0 %v419
    %477 = vmatprep.subr.mxu0 0.0
    %478 = vmatpush1.msra.mxu0 %v420
    %479 = vmatprep.subr.mxu0 0.0
    %480 = vmatpush1.msra.mxu0 %v421
    %481 = vmatprep.subr.mxu0 0.0
    %482 = vmatpush1.msra.mxu0 %v422
    %483 = vmatprep.subr.mxu0 0.0
    %484 = vmatpush1.msra.mxu0 %v423
    %485 = vmatprep.subr.mxu0 0.0
    %486 = vmatpush1.msra.mxu0 %v424
    %487 = vmatprep.subr.mxu0 0.0
    %488 = vmatpush1.msra.mxu0 %v425
    %489 = vmatprep.subr.mxu0 0.0
    %490 = vmatpush1.msra.mxu0 %v426
    %491 = vmatprep.subr.mxu0 0.0
    %492 = vmatpush1.msra.mxu0 %v427
    %493 = vmatprep.subr.mxu0 0.0
    %494 = vmatpush1.msra.mxu0 %v428
    %495 = vmatprep.subr.mxu0 0.0
    %496 = vmatpush1.msra.mxu0 %v429
    %497 = vmatprep.subr.mxu0 0.0
    %498 = vmatpush1.msra.mxu0 %v430
    %499 = vmatprep.mubr.f32.mxu0 %v398
    %500 = vmatmul.mubr.f32.gmra.mrb[0].mxu0 %v397
    %v501 = vpop.f32.mrb[0].mxu0
    %v502 = vadd.f32 %v434, %v501
    %v503 = vpop.f32.mrb[0].mxu0
    %504 = vdwg.mxu0
    %vm505 = vcmask 130048
    %506 = vst.msk [vmem:[#allocation5] sm:$0xff] %vm505, %v502
    // Predicated region
    $region18: #{scalar_two_layer.1} parent=1 // pred_check
      _
    $region19: #{scalar_two_layer.1} parent=1 // pred_check_branch
      %508 = sbr.rel (0) target = $region21
    $region20: #{scalar_two_layer.1} parent=1 // pred_region
      %s510 = ssub.s32 128, 128
      %511 = vsyncadd [#allocation4], %s510
      %s513 = sshll.u32 [#allocation5], 4
      %s514 = int_to_ptr.vmem [resolvable:$true] %s513
      %516 = dma.vmem_to_hbm [thread:$0]  %s514, 128, %s3, [#allocation4]
    $region21: #{scalar_two_layer.1} parent=1 // pred_fallthru
      _
    // Predicated region
    $region22: #{scalar_two_layer.1} parent=1 // pred_check
      _
    $region23: #{scalar_two_layer.1} parent=1 // pred_check_branch
      %518 = sbr.rel (0) target = $region25
    $region24: #{scalar_two_layer.1} parent=1 // pred_region
      %519 = dma.done [#allocation4], 128
    $region25: #{scalar_two_layer.1} parent=1 // pred_fallthru
      _
    %520 = vsyncpa [#allocation3], 1
    %521 = vsyncpa [#allocation4], 1

</llo_original>
